<compile_context>
chip_gen: v7x
topology: tpu7x:2x2x1
jax: 0.10.0
libtpu: 0.0.40
codegen_flags: <defaults>
</compile_context>

<pallas_src>
import jax
import jax.numpy as jnp
from jax.experimental import pallas as pl
from jax.experimental.pallas import tpu as pltpu

_LANES = 128
_BLOCK_ROWS = 8192        # (8192, 128) f32 block = 4 MiB per input per buffer
_SMALL_ROWS = 8192        # single gridless kernel up to 4 MiB per input
_VMEM_LIMIT = 32 * 1024 * 1024


def _sse_small_kernel(yh_ref, y_ref, o_ref):
    """Whole (rows, 128) slab in VMEM; scalar SSE written straight to SMEM."""
    d = yh_ref[...].astype(jnp.float32) - y_ref[...].astype(jnp.float32)
    o_ref[0, 0] = jnp.sum(d * d)


def _make_sse_block_kernel(rows, block_rows):
    """Per-block kernel: (block_rows, 128) diff^2 -> one (8, 128) partial."""
    ragged = (rows % block_rows) != 0

    def kernel(yh_ref, y_ref, o_ref):
        d = yh_ref[...].astype(jnp.float32) - y_ref[...].astype(jnp.float32)
        sq = d * d
        if ragged:
            # Only the last grid step has out-of-range rows; for every other
            # step rem >= block_rows so the select keeps everything.  The
            # kernel is HBM-bound, so the extra VPU select is free, and the
            # select (not arithmetic) also kills any NaN/Inf garbage in the
            # unspecified tail region of the edge block.
            rem = rows - pl.program_id(0) * block_rows
            row_idx = jax.lax.broadcasted_iota(jnp.int32, sq.shape, 0)
            sq = jnp.where(row_idx < rem, sq, 0.0)
        # Collapse to one (8,128) vreg-shaped partial: pure VPU adds; the
        # cross-lane reduce is deferred to the tiny JAX epilogue.
        o_ref[...] = sq.reshape(-1, 8, _LANES).sum(axis=0)

    return kernel


def rmse_loss(yhat, y, eps=1e-6, *, block_rows=_BLOCK_ROWS,
              small_rows=_SMALL_ROWS):
    """sqrt(mean((yhat - y)**2) + eps), matching torch RMSELoss.forward."""
    assert yhat.shape == y.shape, (yhat.shape, y.shape)
    assert block_rows % 8 == 0
    n = yhat.size

    yh = yhat.reshape(-1)
    yy = y.reshape(-1)

    lane_pad = (-n) % _LANES
    if lane_pad:
        # TODO(synk): rare case (element count not a multiple of 128); this
        # pad copies the flat inputs once.  Could be removed with 1-D
        # element-index-masked blocks at the cost of an in-kernel 1D->2D
        # reshape.  Zero padding contributes 0 to the SSE; denominator is n.
        yh = jnp.pad(yh, (0, lane_pad))
        yy = jnp.pad(yy, (0, lane_pad))
    rows = (n + lane_pad) // _LANES
    yh2 = yh.reshape(rows, _LANES)
    yy2 = yy.reshape(rows, _LANES)

    if rows <= small_rows:
        # Single-block fast path (covers the shipped (2, 4, 16, 16) shape).
        sse = pl.pallas_call(
            _sse_small_kernel,
            out_shape=jax.ShapeDtypeStruct((1, 1), jnp.float32),
            out_specs=pl.BlockSpec(memory_space=pltpu.MemorySpace.SMEM),
        )(yh2, yy2)[0, 0]
    else:
        num_blocks = pl.cdiv(rows, block_rows)
        in_spec = pl.BlockSpec((block_rows, _LANES), lambda b: (b, 0))
        partials = pl.pallas_call(
            _make_sse_block_kernel(rows, block_rows),
            out_shape=jax.ShapeDtypeStruct((num_blocks * 8, _LANES),
                                           jnp.float32),
            grid=(num_blocks,),
            in_specs=[in_spec, in_spec],
            out_specs=pl.BlockSpec((8, _LANES), lambda b: (b, 0)),
            compiler_params=pltpu.CompilerParams(
                dimension_semantics=("parallel",),
                vmem_limit_bytes=_VMEM_LIMIT),
        )(yh2, yy2)
        sse = jnp.sum(partials)

    # Trivial epilogue: eps / n stay runtime-parameterizable, not baked in.
    return jnp.sqrt(sse / n + eps)


if __name__ == "__main__":
    key = jax.random.PRNGKey(0)
    k1, k2, k3, k4, k5, k6 = jax.random.split(key, 6)

    def ref_rmse(a, b, eps=1e-6):
        return jnp.sqrt(jnp.mean((a - b) ** 2) + eps)

    # 1) Spec shape: NCHW (2, 4, 16, 16) -> single-block SMEM-scalar path.
    yhat = jax.random.normal(k1, (2, 4, 16, 16), dtype=jnp.float32)
    y = jax.random.normal(k2, (2, 4, 16, 16), dtype=jnp.float32)
    loss = rmse_loss(yhat, y)
    jax.block_until_ready(loss)
    assert jnp.allclose(loss, ref_rmse(yhat, y), rtol=1e-5, atol=1e-6), \
        (loss, ref_rmse(yhat, y))

    # 2) Tiled "parallel" grid path incl. ragged last-block masking:
    #    (2, 4, 40, 64) = 20480 elems -> 160 rows; block_rows=48 -> 4 blocks,
    #    last block has only 16 valid rows (mask exercised).
    yhat2 = jax.random.normal(k3, (2, 4, 40, 64), dtype=jnp.float32)
    y2 = jax.random.normal(k4, (2, 4, 40, 64), dtype=jnp.float32)
    loss2 = rmse_loss(yhat2, y2, block_rows=48, small_rows=64)
    jax.block_until_ready(loss2)
    assert jnp.allclose(loss2, ref_rmse(yhat2, y2), rtol=1e-5, atol=1e-6), \
        (loss2, ref_rmse(yhat2, y2))

    # 3) Lane-unaligned element count (rare minimal-tail-pad path).
    yhat3 = jax.random.normal(k5, (3, 5, 7), dtype=jnp.float32)
    y3 = jax.random.normal(k6, (3, 5, 7), dtype=jnp.float32)
    loss3 = rmse_loss(yhat3, y3)
    jax.block_until_ready(loss3)
    assert jnp.allclose(loss3, ref_rmse(yhat3, y3), rtol=1e-5, atol=1e-6), \
        (loss3, ref_rmse(yhat3, y3))

    print("KERNEL_OK")
</pallas_src>

<mosaic_0001>
module attributes {stable_mosaic.version = 11 : i64} {
  func.func @_sse_small_kernel(%arg0: memref<16x128xf32, #tpu.memory_space<vmem>>, %arg1: memref<16x128xf32, #tpu.memory_space<vmem>>, %arg2: memref<1x1xf32, #tpu.memory_space<smem>>) attributes {dimension_semantics = [], scalar_prefetch = 0 : i64, scratch_operands = 0 : i64, tpu.core_type = #tpu.core_type<tc>} {
    %c0 = arith.constant 0 : index
    %c0_0 = arith.constant 0 : index
    %0 = vector.load %arg0[%c0, %c0_0] : memref<16x128xf32, #tpu.memory_space<vmem>>, vector<16x128xf32>
    %c0_1 = arith.constant 0 : index
    %c0_2 = arith.constant 0 : index
    %1 = vector.load %arg1[%c0_1, %c0_2] : memref<16x128xf32, #tpu.memory_space<vmem>>, vector<16x128xf32>
    %2 = arith.subf %0, %1 : vector<16x128xf32>
    %3 = arith.mulf %2, %2 : vector<16x128xf32>
    %4 = vector.shape_cast %3 : vector<16x128xf32> to vector<1x16x128xf32>
    %cst = arith.constant dense<0.000000e+00> : vector<1xf32>
    %5 = vector.multi_reduction <add>, %4, %cst [1, 2] : vector<1x16x128xf32> to vector<1xf32>
    %6 = vector.shape_cast %5 : vector<1xf32> to vector<1x1x1xf32>
    %7 = vector.extract %6[0, 0, 0] : f32 from vector<1x1x1xf32>
    %c0_3 = arith.constant 0 : index
    %c0_4 = arith.constant 0 : index
    %8 = memref.load %arg2[%c0_3, %c0_4] : memref<1x1xf32, #tpu.memory_space<smem>>
    memref.store %7, %arg2[%c0_3, %c0_4] : memref<1x1xf32, #tpu.memory_space<smem>>
    return
  }
}

</mosaic_0001>

<llo_original>
// kernel: tpu_custom_call.1
$region0: #{tpu_custom_call.1}
  #allocation0 [shape = 'u32[]', space=smem, size = 0x4, offset = 0x4, fixed_abs, tag = 'smem constant byte address 0x4 - core index']
  #allocation1 [shape = 'u32[144,128]{1,0:T(1,128)}', space=vmem, size = 0x12000, scoped, tag = 'internal scratch']
  %s0 = inlined_call_operand.hbm [shape: f32[16,128], index: 0, kind: input, shape index: {}]
  %s1 = inlined_call_operand.hbm [shape: f32[16,128], index: 1, kind: input, shape index: {}]
  %s2 = inlined_call_operand.hbm [shape: f32[1,1], index: 2, kind: output, shape index: {}]
  %s3 = sld [smem:[#allocation0]]
  $region26: #{tpu_custom_call.1} parent=0
    _
  %s5 = ssub.s32 1, %s3
  %s6 = scalar_select 0, %s5, %s3
  $region1: #{tpu_custom_call.1} parent=0
    #allocation2 [shape = 'u8[8192]{0}', space=vmem, size = 0x2000, scoped, tag = 'input window, operand 0, single buffered']
    #allocation3 [shape = 's32[1]{0}', space=sflag, size = 0x4, scoped, tag = 'scoped memory for tpu_custom_call.1']
    #allocation4 [shape = 's32[1]{0}', space=sflag, size = 0x4, scoped, tag = 'scoped memory for tpu_custom_call.1']
    #allocation5 [shape = 'u8[8192]{0}', space=vmem, size = 0x2000, scoped, tag = 'input window, operand 1, single buffered']
    #allocation6 [shape = 's32[1]{0}', space=sflag, size = 0x4, scoped, tag = 'scoped memory for tpu_custom_call.1']
    #allocation7 [shape = 'u8[512]{0}', space=smem, size = 0x200, scoped, tag = 'output window, operand 0, single buffered']
    %7 = vsyncpa [#allocation3], 0
    %8 = vsyncpa [#allocation6], 0
    %9 = vsyncpa [#allocation4], 0
    // Predicated region
    $region2: #{tpu_custom_call.1} parent=1 // pred_check
      _
    $region3: #{tpu_custom_call.1} parent=1 // pred_check_branch
      %11 = sbr.rel (0) target = $region5
    $region4: #{tpu_custom_call.1} parent=1 // pred_region
      %s13 = ssub.s32 256, 256
      %14 = vsyncadd [#allocation3], %s13
      %s15 = sshll.u32 [#allocation2], 4
      %s16 = int_to_ptr.vmem [resolvable:$true] %s15
      %21 = dma.hbm_to_vmem [thread:$0]  %s0, 256, %s16, [#allocation3], 128, 128, 8
    $region5: #{tpu_custom_call.1} parent=1 // pred_fallthru
      _
    // Predicated region
    $region6: #{tpu_custom_call.1} parent=1 // pred_check
      _
    $region7: #{tpu_custom_call.1} parent=1 // pred_check_branch
      %23 = sbr.rel (0) target = $region9
    $region8: #{tpu_custom_call.1} parent=1 // pred_region
      %s25 = ssub.s32 256, 256
      %26 = vsyncadd [#allocation6], %s25
      %s27 = sshll.u32 [#allocation5], 4
      %s28 = int_to_ptr.vmem [resolvable:$true] %s27
      %33 = dma.hbm_to_vmem [thread:$0]  %s1, 256, %s28, [#allocation6], 128, 128, 8
    $region9: #{tpu_custom_call.1} parent=1 // pred_fallthru
      _
    // Predicated region
    $region10: #{tpu_custom_call.1} parent=1 // pred_check
      _
    $region11: #{tpu_custom_call.1} parent=1 // pred_check_branch
      %35 = sbr.rel (0) target = $region13
    $region12: #{tpu_custom_call.1} parent=1 // pred_region
      %36 = dma.done [#allocation3], 256
    $region13: #{tpu_custom_call.1} parent=1 // pred_fallthru
      _
    // Predicated region
    $region14: #{tpu_custom_call.1} parent=1 // pred_check
      _
    $region15: #{tpu_custom_call.1} parent=1 // pred_check_branch
      %38 = sbr.rel (0) target = $region17
    $region16: #{tpu_custom_call.1} parent=1 // pred_region
      %39 = dma.done [#allocation6], 256
    $region17: #{tpu_custom_call.1} parent=1 // pred_fallthru
      _
    %v40 = vld [vmem:[#allocation2] sm:$0xff]
    %v41 = vld [vmem:[#allocation2 + $0x8] sm:$0xff]
    %v42 = vld [vmem:[#allocation5] sm:$0xff]
    %v43 = vld [vmem:[#allocation5 + $0x8] sm:$0xff]
    %v44 = vsub.f32 %v40, %v42
    %v45 = vsub.f32 %v41, %v43
    %v46 = vmul.f32 %v44, %v44
    %v47 = vmul.f32 %v45, %v45
    %v48 = vadd.f32 %v46, %v47
    %49 = vadd.xlane.f32.xlu0 %v48
    %v50 = vpop.xlane.xlu0 %49
    %v51 = vrot.slane %v50, 4
    %v52 = vadd.f32 %v50, %v51
    %v53 = vrot.slane %v52, 2
    %v54 = vadd.f32 %v52, %v53
    %v55 = vrot.slane %v54, 1
    %v56 = vadd.f32 %v54, %v55
    %s57 = vtos %v56
    %s58 = scalar_lea.smem [#allocation7], 0
    %59 = sst [smem:[%s58]] %s57
    // Predicated region
    $region18: #{tpu_custom_call.1} parent=1 // pred_check
      _
    $region19: #{tpu_custom_call.1} parent=1 // pred_check_branch
      %61 = sbr.rel (0) target = $region21
    $region20: #{tpu_custom_call.1} parent=1 // pred_region
      %s63 = ssub.s32 16, 16
      %64 = vsyncadd [#allocation4], %s63
      %67 = dma.smem_to_hbm [#allocation7], 16, %s2, [#allocation4]
    $region21: #{tpu_custom_call.1} parent=1 // pred_fallthru
      _
    // Predicated region
    $region22: #{tpu_custom_call.1} parent=1 // pred_check
      _
    $region23: #{tpu_custom_call.1} parent=1 // pred_check_branch
      %69 = sbr.rel (0) target = $region25
    $region24: #{tpu_custom_call.1} parent=1 // pred_region
      %70 = dma.done [#allocation4], 16
    $region25: #{tpu_custom_call.1} parent=1 // pred_fallthru
      _
    %71 = sfence
    %72 = vsyncpa [#allocation3], 1
    %73 = vsyncpa [#allocation6], 1
    %74 = vsyncpa [#allocation4], 1

</llo_original>
